<compile_context>
chip_gen: v6e
topology: v6e:2x2x1
jax: 0.10.0
libtpu: 0.0.40
codegen_flags: <defaults>
</compile_context>

<pallas_src>
import functools

import jax
import jax.numpy as jnp
from jax.experimental import pallas as pl
from jax.experimental.pallas import tpu as pltpu

_LANES = 128
_NEG = -1.0e30

# weight-slab block indices (each block is one 128x128 tile of the slab)
_W_Q1, _W_Q2, _W_ZX, _W_ZY, _W_ML, _W_YML, _W_R1, _W_R2 = range(8)
# bias-slab rows
_B_Q1, _B_Q2, _B_Z1, _B_ML, _B_YML, _B_R1, _B_R2 = range(7)
# output regions (each 128 lanes wide -> every store is lane-aligned)
_O_LOGITS, _O_PROB, _O_Y, _O_ML, _O_YML, _O_Z, _O_DEC = range(7)
_OUT_W = 7 * _LANES


# ------------------------------- fused kernel --------------------------------


def _gmm_fused_kernel(x_ref, u_ref, eps_ref, w_ref, b_ref, out_ref, *,
                      dims, temperature, hard, is_sampling):
    B, Din, H, K, Z = dims
    L = _LANES
    f32, bf16 = jnp.float32, jnp.bfloat16
    inv_t = 1.0 / float(temperature)

    def wv(i):      # full-width, tile-aligned 128x128 weight view (zero-cost)
        return w_ref[i * L:(i + 1) * L, :]

    def bv(i):      # one bias row [1, 128], broadcast against [B, 128]
        return b_ref[i:i + 1, :]

    def mm(a, i):   # bf16 MXU operands, f32 accumulation (single-pass matmul)
        return jnp.dot(a.astype(bf16), wv(i), preferred_element_type=f32)

    x = x_ref[...]                         # [B, 128] bf16; lanes >= Din are 0

    # ---- q(y|x): 2-layer MLP -> categorical logits / prob ----
    h1 = jnp.maximum(mm(x, _W_Q1) + bv(_B_Q1), 0.0)          # [B, 128] f32
    logits = mm(h1, _W_Q2) + bv(_B_Q2)                       # pad lanes ~ -1e30
    m = jnp.max(logits, axis=-1, keepdims=True)
    e = jnp.exp(logits - m)
    prob = e / jnp.sum(e, axis=-1, keepdims=True)            # exact softmax

    # ---- gumbel-softmax sample (noise supplied by the wrapper) ----
    u = jnp.clip(u_ref[...], 1e-7, 1.0 - 1e-7)
    gl = (logits - jnp.log(-jnp.log(u))) * inv_t
    gm = jnp.max(gl, axis=-1, keepdims=True)
    ge = jnp.exp(gl - gm)
    y = ge / jnp.sum(ge, axis=-1, keepdims=True)
    if hard:
        # straight-through forward value: exactly one 1.0 at the first argmax
        lane = jax.lax.broadcasted_iota(jnp.int32, (B, L), 1)
        is_max = y >= jnp.max(y, axis=-1, keepdims=True)
        first = jnp.min(jnp.where(is_max, lane, L), axis=-1, keepdims=True)
        y = (lane == first).astype(f32)

    # ---- q(z|x,y): h2 = relu(x @ Wz_x + y @ Wz_y + b)  (no lane concat) ----
    h2 = jnp.maximum(mm(x, _W_ZX) + mm(y, _W_ZY) + bv(_B_Z1), 0.0)
    ml = mm(h2, _W_ML) + bv(_B_ML)                 # [mean | logv | 0-pad]
    mean = ml[:, 0:Z]
    if is_sampling:
        logv = ml[:, Z:2 * Z]
        z_out = mean + jnp.exp(0.5 * logv) * eps_ref[:, 0:Z]   # reparameterize
    else:
        z_out = mean          # eval path: decode from the posterior mean

    # ---- p(z|y): fused y_mu | y_logv head (stored un-split) ----
    yml = mm(y, _W_YML) + bv(_B_YML)               # [ymu | ylogv | 0-pad]

    # ---- prior_net.reconstruct_to_input(z): 2-layer MLP ----
    wr1 = w_ref[_W_R1 * L:_W_R1 * L + Z, :]        # only the first Z rows used
    h3 = jnp.maximum(
        jnp.dot(z_out.astype(bf16), wr1, preferred_element_type=f32)
        + bv(_B_R1), 0.0)
    dec = mm(h3, _W_R2) + bv(_B_R2)                # lanes >= Din are 0

    # ---- direct, 128-lane-aligned stores (no output concatenation) ----
    out_ref[:, _O_LOGITS * L:(_O_LOGITS + 1) * L] = logits
    out_ref[:, _O_PROB * L:(_O_PROB + 1) * L] = prob
    out_ref[:, _O_Y * L:(_O_Y + 1) * L] = y
    out_ref[:, _O_ML * L:(_O_ML + 1) * L] = ml
    out_ref[:, _O_YML * L:(_O_YML + 1) * L] = yml
    out_ref[:, _O_Z * L:_O_Z * L + Z] = z_out
    out_ref[:, _O_DEC * L:(_O_DEC + 1) * L] = dec


# ------------------------- parameter init & packing --------------------------


def _linear_params(key, in_dim, out_dim):
    # PyTorch nn.Linear default init: U(-1/sqrt(in), 1/sqrt(in)); W stored [in, out].
    kw, kb = jax.random.split(key)
    bound = 1.0 / jnp.sqrt(jnp.float32(in_dim))
    w = jax.random.uniform(kw, (in_dim, out_dim), jnp.float32, -bound, bound)
    b = jax.random.uniform(kb, (1, out_dim), jnp.float32, -bound, bound)
    return w, b


def init_gmm_params(key, input_dim, latent_dim, num_components, hidden_dim):
    keys = jax.random.split(key, 9)
    p = {}
    p["wq1"], p["bq1"] = _linear_params(keys[0], input_dim, hidden_dim)       # q(y|x) L1
    p["wq2"], p["bq2"] = _linear_params(keys[1], hidden_dim, num_components)  # q(y|x) L2
    p["wz"], p["bz1"] = _linear_params(keys[2], input_dim + num_components, hidden_dim)
    p["wmu"], p["bmu"] = _linear_params(keys[3], hidden_dim, latent_dim)
    p["wlv"], p["blv"] = _linear_params(keys[4], hidden_dim, latent_dim)
    p["wymu"], p["bymu"] = _linear_params(keys[5], num_components, latent_dim)
    p["wylv"], p["bylv"] = _linear_params(keys[6], num_components, latent_dim)
    p["wr1"], p["br1"] = _linear_params(keys[7], latent_dim, hidden_dim)      # reconstruct L1
    p["wr2"], p["br2"] = _linear_params(keys[8], hidden_dim, input_dim)       # reconstruct L2
    return p


def pack_gmm_params(p):
    """Pack weights into one bf16 [8*128, 128] slab and biases into an f32 [8, 128] slab."""
    Din, H = p["wq1"].shape
    K = p["wq2"].shape[1]
    Z = p["wmu"].shape[1]
    L = _LANES
    assert max(Din, H, K, 2 * Z) <= L

    wz = p["wz"]                                   # [(Din + K), H]
    blocks = [
        p["wq1"],                                  # _W_Q1  [Din, H]
        p["wq2"],                                  # _W_Q2  [H, K]
        wz[:Din, :],                               # _W_ZX  [Din, H]
        wz[Din:, :],                               # _W_ZY  [K, H]
        jnp.concatenate([p["wmu"], p["wlv"]], 1),  # _W_ML  [H, 2Z]
        jnp.concatenate([p["wymu"], p["wylv"]], 1),# _W_YML [K, 2Z]
        p["wr1"],                                  # _W_R1  [Z, H]
        p["wr2"],                                  # _W_R2  [H, Din]
    ]
    wslab = jnp.zeros((len(blocks) * L, L), jnp.float32)
    for i, w in enumerate(blocks):
        r, c = w.shape
        wslab = wslab.at[i * L:i * L + r, :c].set(w)
    wslab = wslab.astype(jnp.bfloat16)             # single-pass MXU operands

    bslab = jnp.zeros((8, L), jnp.float32)
    bslab = bslab.at[_B_Q2, :].set(_NEG)           # -1e30 pad -> softmax ignores pad lanes
    bslab = bslab.at[_B_Q1, :H].set(p["bq1"].reshape(-1))
    bslab = bslab.at[_B_Q2, :K].set(p["bq2"].reshape(-1))
    bslab = bslab.at[_B_Z1, :H].set(p["bz1"].reshape(-1))
    bslab = bslab.at[_B_ML, :2 * Z].set(
        jnp.concatenate([p["bmu"].reshape(-1), p["blv"].reshape(-1)]))
    bslab = bslab.at[_B_YML, :2 * Z].set(
        jnp.concatenate([p["bymu"].reshape(-1), p["bylv"].reshape(-1)]))
    bslab = bslab.at[_B_R1, :H].set(p["br1"].reshape(-1))
    bslab = bslab.at[_B_R2, :Din].set(p["br2"].reshape(-1))

    return {"wslab": wslab, "bslab": bslab, "dims": (Din, H, K, Z)}


# ------------------------ GMMLatentConstructor forward -----------------------


def gmm_latent_constructor_forward(
    input_ret, packed, *, d_hidden, latent_size, enc_factor, batch_first,
    is_sampling=True, temperature=1.0, hard=0, rng=None,
):
    hidden = input_ret["hidden"]
    B = input_ret["batch_size"]

    # ----- map_to_latent glue: [enc_factor, B, d_hidden] -> [B, Din] -----
    if not batch_first:
        hidden = jnp.transpose(hidden, (1, 0, 2))
    x = jnp.reshape(hidden, (B, d_hidden * enc_factor)).astype(jnp.float32)

    Din, H, K, Z = packed["dims"]
    assert Din == d_hidden * enc_factor and Z == latent_size
    assert max(Din, H, K, 2 * Z) <= _LANES

    # pad x to a full 128-lane vreg width, cast to bf16 (unmasked loads, 1-pass MXU)
    x = jnp.pad(x, ((0, 0), (0, _LANES - Din))).astype(jnp.bfloat16)

    # noise is generated host-side (hardware PRNG has no interpret/CPU lowering)
    ku, ke = jax.random.split(rng)
    u = jax.random.uniform(ku, (B, _LANES), jnp.float32)     # gumbel base
    eps = jax.random.normal(ke, (B, _LANES), jnp.float32)    # reparam noise

    flops = 2 * B * (Din * H + H * K + Din * H + K * H + H * 2 * Z
                     + K * 2 * Z + Z * H + H * Din)
    cost = pl.CostEstimate(
        flops=flops,
        transcendentals=B * (4 * _LANES + Z),
        bytes_accessed=(2 * (x.size + packed["wslab"].size)
                        + 4 * (u.size + eps.size + packed["bslab"].size
                               + B * _OUT_W)),
    )

    kernel = functools.partial(
        _gmm_fused_kernel,
        dims=(B, Din, H, K, Z),
        temperature=float(temperature),
        hard=int(hard),
        is_sampling=bool(is_sampling),
    )

    vmem = pl.BlockSpec(memory_space=pltpu.MemorySpace.VMEM)
    # No grid: the whole problem is one block (all operands << VMEM).  If this
    # layer were hot inside a scan, add a step grid axis with constant-index
    # weight BlockSpecs (resident weights; "parallel" on v7x).
    out = pl.pallas_call(
        kernel,
        out_shape=jax.ShapeDtypeStruct((B, _OUT_W), jnp.float32),
        in_specs=[vmem, vmem, vmem, vmem, vmem],
        out_specs=vmem,
        cost_estimate=cost,
    )(x, u, eps, packed["wslab"], packed["bslab"])

    # ----- unpack the region-aligned output slab (cheap XLA slices) -----
    L = _LANES
    input_ret["logits"] = out[:, _O_LOGITS * L:_O_LOGITS * L + K]
    input_ret["prob_cat"] = out[:, _O_PROB * L:_O_PROB * L + K]
    input_ret["categorical"] = out[:, _O_Y * L:_O_Y * L + K]
    input_ret["mean"] = out[:, _O_ML * L:_O_ML * L + Z]
    input_ret["logv"] = out[:, _O_ML * L + Z:_O_ML * L + 2 * Z]
    input_ret["prior_mean"] = out[:, _O_YML * L:_O_YML * L + Z]
    input_ret["prior_logv"] = out[:, _O_YML * L + Z:_O_YML * L + 2 * Z]
    input_ret["z"] = out[:, _O_Z * L:_O_Z * L + Z]
    dec = out[:, _O_DEC * L:_O_DEC * L + Din]

    # ----- reconstruct glue: [B, Din] -> [enc_factor, B, d_hidden] -----
    if enc_factor > 1:
        dec = jnp.reshape(dec, (B, enc_factor, d_hidden))
    if not batch_first:
        dec = jnp.transpose(dec, (1, 0, 2))
    input_ret["decode_init"] = dec
    return input_ret


# ---------------------------------- main --------------------------------------

if __name__ == "__main__":
    # args: d_hidden=32, latent_size=16, bidir=True, enc_num_layers=1
    #       (enc_factor=2), num_components=10, batch_first=False, batch=8
    d_hidden = 32
    latent_size = 16
    enc_factor = 2
    num_components = 10
    batch = 8
    batch_first = False
    input_dim = d_hidden * enc_factor

    root = jax.random.PRNGKey(0)
    k_param, k_hidden, k_noise = jax.random.split(root, 3)

    params = init_gmm_params(k_param, input_dim, latent_size, num_components,
                             d_hidden)
    packed = pack_gmm_params(params)

    hidden = jax.random.normal(k_hidden, (enc_factor, batch, d_hidden),
                               jnp.float32)
    input_ret = {"hidden": hidden, "batch_size": batch}

    out = gmm_latent_constructor_forward(
        input_ret, packed,
        d_hidden=d_hidden, latent_size=latent_size, enc_factor=enc_factor,
        batch_first=batch_first, is_sampling=True, temperature=1.0, hard=0,
        rng=k_noise,
    )

    jax.block_until_ready(out["decode_init"])
    assert out["logits"].shape == (batch, num_components)
    assert out["prob_cat"].shape == (batch, num_components)
    assert out["categorical"].shape == (batch, num_components)
    assert out["mean"].shape == (batch, latent_size)
    assert out["logv"].shape == (batch, latent_size)
    assert out["z"].shape == (batch, latent_size)
    assert out["prior_mean"].shape == (batch, latent_size)
    assert out["prior_logv"].shape == (batch, latent_size)
    assert out["decode_init"].shape == (enc_factor, batch, d_hidden)
    assert bool(jnp.all(jnp.isfinite(out["decode_init"])))
    assert bool(jnp.all(jnp.isfinite(out["z"])))
    assert bool(jnp.all(jnp.abs(jnp.sum(out["prob_cat"], axis=-1) - 1.0) < 1e-3))
    print("KERNEL_OK")
</pallas_src>

<mosaic_0001>
module attributes {stable_mosaic.version = 11 : i64} {
  func.func @_gmm_fused_kernel(%arg0: memref<8x128xbf16, #tpu.memory_space<vmem>>, %arg1: memref<8x128xf32, #tpu.memory_space<vmem>>, %arg2: memref<8x128xf32, #tpu.memory_space<vmem>>, %arg3: memref<1024x128xbf16, #tpu.memory_space<vmem>>, %arg4: memref<8x128xf32, #tpu.memory_space<vmem>>, %arg5: memref<8x896xf32, #tpu.memory_space<vmem>>) attributes {dimension_semantics = [], scalar_prefetch = 0 : i64, scratch_operands = 0 : i64, tpu.core_type = #tpu.core_type<tc>} {
    %c0 = arith.constant 0 : index
    %c0_0 = arith.constant 0 : index
    %0 = vector.load %arg0[%c0, %c0_0] : memref<8x128xbf16, #tpu.memory_space<vmem>>, vector<8x128xbf16>
    %c0_1 = arith.constant 0 : index
    %c0_2 = arith.constant 0 : index
    %1 = vector.load %arg3[%c0_1, %c0_2] : memref<1024x128xbf16, #tpu.memory_space<vmem>>, vector<128x128xbf16>
    %cst = arith.constant dense<0.000000e+00> : vector<8x128xf32>
    %2 = tpu.matmul %0, %1, %cst {dimension_numbers = #tpu.dot_dimension_numbers<[1], [0], [0], [1], [0, 0, 1, 1], [], []>} : vector<8x128xbf16>, vector<128x128xbf16>, vector<8x128xf32> -> vector<8x128xf32>
    %c0_3 = arith.constant 0 : index
    %c0_4 = arith.constant 0 : index
    %3 = vector.load %arg4[%c0_3, %c0_4] : memref<8x128xf32, #tpu.memory_space<vmem>>, vector<1x128xf32>
    %4 = vector.broadcast %3 : vector<1x128xf32> to vector<8x128xf32>
    %5 = arith.addf %2, %4 : vector<8x128xf32>
    %cst_5 = arith.constant 0.000000e+00 : f32
    %6 = vector.broadcast %cst_5 : f32 to vector<8x128xf32>
    %7 = arith.maximumf %5, %6 : vector<8x128xf32>
    %8 = arith.truncf %7 : vector<8x128xf32> to vector<8x128xbf16>
    %c128 = arith.constant 128 : index
    %c0_6 = arith.constant 0 : index
    %9 = vector.load %arg3[%c128, %c0_6] : memref<1024x128xbf16, #tpu.memory_space<vmem>>, vector<128x128xbf16>
    %cst_7 = arith.constant dense<0.000000e+00> : vector<8x128xf32>
    %10 = tpu.matmul %8, %9, %cst_7 {dimension_numbers = #tpu.dot_dimension_numbers<[1], [0], [0], [1], [0, 0, 1, 1], [], []>} : vector<8x128xbf16>, vector<128x128xbf16>, vector<8x128xf32> -> vector<8x128xf32>
    %c1 = arith.constant 1 : index
    %c0_8 = arith.constant 0 : index
    %11 = vector.load %arg4[%c1, %c0_8] : memref<8x128xf32, #tpu.memory_space<vmem>>, vector<1x128xf32>
    %12 = vector.broadcast %11 : vector<1x128xf32> to vector<8x128xf32>
    %13 = arith.addf %10, %12 : vector<8x128xf32>
    %cst_9 = arith.constant dense<0xFF800000> : vector<8xf32>
    %14 = vector.multi_reduction <maximumf>, %13, %cst_9 [1] : vector<8x128xf32> to vector<8xf32>
    %15 = vector.shape_cast %14 : vector<8xf32> to vector<8x1xf32>
    %16 = vector.broadcast %15 : vector<8x1xf32> to vector<8x128xf32>
    %17 = arith.subf %13, %16 : vector<8x128xf32>
    %18 = math.exp %17 : vector<8x128xf32>
    %cst_10 = arith.constant dense<0.000000e+00> : vector<8xf32>
    %19 = vector.multi_reduction <add>, %18, %cst_10 [1] : vector<8x128xf32> to vector<8xf32>
    %20 = vector.shape_cast %19 : vector<8xf32> to vector<8x1xf32>
    %21 = vector.broadcast %20 : vector<8x1xf32> to vector<8x128xf32>
    %22 = arith.divf %18, %21 : vector<8x128xf32>
    %c0_11 = arith.constant 0 : index
    %c0_12 = arith.constant 0 : index
    %23 = vector.load %arg1[%c0_11, %c0_12] : memref<8x128xf32, #tpu.memory_space<vmem>>, vector<8x128xf32>
    %cst_13 = arith.constant 1.000000e-07 : f32
    %cst_14 = arith.constant 0.99999988 : f32
    %24 = vector.broadcast %cst_13 : f32 to vector<8x128xf32>
    %25 = arith.maximumf %24, %23 : vector<8x128xf32>
    %26 = vector.broadcast %cst_14 : f32 to vector<8x128xf32>
    %27 = arith.minimumf %26, %25 : vector<8x128xf32>
    %28 = math.log %27 : vector<8x128xf32>
    %cst_15 = arith.constant 0.000000e+00 : f32
    %29 = vector.broadcast %cst_15 : f32 to vector<8x128xf32>
    %30 = arith.subf %29, %28 : vector<8x128xf32>
    %31 = math.log %30 : vector<8x128xf32>
    %32 = arith.subf %13, %31 : vector<8x128xf32>
    %cst_16 = arith.constant 1.000000e+00 : f32
    %33 = vector.broadcast %cst_16 : f32 to vector<8x128xf32>
    %34 = arith.mulf %32, %33 : vector<8x128xf32>
    %cst_17 = arith.constant dense<0xFF800000> : vector<8xf32>
    %35 = vector.multi_reduction <maximumf>, %34, %cst_17 [1] : vector<8x128xf32> to vector<8xf32>
    %36 = vector.shape_cast %35 : vector<8xf32> to vector<8x1xf32>
    %37 = vector.broadcast %36 : vector<8x1xf32> to vector<8x128xf32>
    %38 = arith.subf %34, %37 : vector<8x128xf32>
    %39 = math.exp %38 : vector<8x128xf32>
    %cst_18 = arith.constant dense<0.000000e+00> : vector<8xf32>
    %40 = vector.multi_reduction <add>, %39, %cst_18 [1] : vector<8x128xf32> to vector<8xf32>
    %41 = vector.shape_cast %40 : vector<8xf32> to vector<8x1xf32>
    %42 = vector.broadcast %41 : vector<8x1xf32> to vector<8x128xf32>
    %43 = arith.divf %39, %42 : vector<8x128xf32>
    %c256 = arith.constant 256 : index
    %c0_19 = arith.constant 0 : index
    %44 = vector.load %arg3[%c256, %c0_19] : memref<1024x128xbf16, #tpu.memory_space<vmem>>, vector<128x128xbf16>
    %cst_20 = arith.constant dense<0.000000e+00> : vector<8x128xf32>
    %45 = tpu.matmul %0, %44, %cst_20 {dimension_numbers = #tpu.dot_dimension_numbers<[1], [0], [0], [1], [0, 0, 1, 1], [], []>} : vector<8x128xbf16>, vector<128x128xbf16>, vector<8x128xf32> -> vector<8x128xf32>
    %46 = arith.truncf %43 : vector<8x128xf32> to vector<8x128xbf16>
    %c384 = arith.constant 384 : index
    %c0_21 = arith.constant 0 : index
    %47 = vector.load %arg3[%c384, %c0_21] : memref<1024x128xbf16, #tpu.memory_space<vmem>>, vector<128x128xbf16>
    %cst_22 = arith.constant dense<0.000000e+00> : vector<8x128xf32>
    %48 = tpu.matmul %46, %47, %cst_22 {dimension_numbers = #tpu.dot_dimension_numbers<[1], [0], [0], [1], [0, 0, 1, 1], [], []>} : vector<8x128xbf16>, vector<128x128xbf16>, vector<8x128xf32> -> vector<8x128xf32>
    %49 = arith.addf %45, %48 : vector<8x128xf32>
    %c2 = arith.constant 2 : index
    %c0_23 = arith.constant 0 : index
    %50 = vector.load %arg4[%c2, %c0_23] : memref<8x128xf32, #tpu.memory_space<vmem>>, vector<1x128xf32>
    %51 = vector.broadcast %50 : vector<1x128xf32> to vector<8x128xf32>
    %52 = arith.addf %49, %51 : vector<8x128xf32>
    %cst_24 = arith.constant 0.000000e+00 : f32
    %53 = vector.broadcast %cst_24 : f32 to vector<8x128xf32>
    %54 = arith.maximumf %52, %53 : vector<8x128xf32>
    %55 = arith.truncf %54 : vector<8x128xf32> to vector<8x128xbf16>
    %c512 = arith.constant 512 : index
    %c0_25 = arith.constant 0 : index
    %56 = vector.load %arg3[%c512, %c0_25] : memref<1024x128xbf16, #tpu.memory_space<vmem>>, vector<128x128xbf16>
    %cst_26 = arith.constant dense<0.000000e+00> : vector<8x128xf32>
    %57 = tpu.matmul %55, %56, %cst_26 {dimension_numbers = #tpu.dot_dimension_numbers<[1], [0], [0], [1], [0, 0, 1, 1], [], []>} : vector<8x128xbf16>, vector<128x128xbf16>, vector<8x128xf32> -> vector<8x128xf32>
    %c3 = arith.constant 3 : index
    %c0_27 = arith.constant 0 : index
    %58 = vector.load %arg4[%c3, %c0_27] : memref<8x128xf32, #tpu.memory_space<vmem>>, vector<1x128xf32>
    %59 = vector.broadcast %58 : vector<1x128xf32> to vector<8x128xf32>
    %60 = arith.addf %57, %59 : vector<8x128xf32>
    %61 = vector.extract_strided_slice %60 {offsets = [0, 0], sizes = [8, 16], strides = [1, 1]} : vector<8x128xf32> to vector<8x16xf32>
    %62 = vector.extract_strided_slice %60 {offsets = [0, 16], sizes = [8, 16], strides = [1, 1]} : vector<8x128xf32> to vector<8x16xf32>
    %cst_28 = arith.constant 5.000000e-01 : f32
    %63 = vector.broadcast %cst_28 : f32 to vector<8x16xf32>
    %64 = arith.mulf %63, %62 : vector<8x16xf32>
    %65 = math.exp %64 : vector<8x16xf32>
    %c0_29 = arith.constant 0 : index
    %c0_30 = arith.constant 0 : index
    %66 = vector.load %arg2[%c0_29, %c0_30] : memref<8x128xf32, #tpu.memory_space<vmem>>, vector<8x16xf32>
    %67 = arith.mulf %65, %66 : vector<8x16xf32>
    %68 = arith.addf %61, %67 : vector<8x16xf32>
    %69 = arith.truncf %43 : vector<8x128xf32> to vector<8x128xbf16>
    %c640 = arith.constant 640 : index
    %c0_31 = arith.constant 0 : index
    %70 = vector.load %arg3[%c640, %c0_31] : memref<1024x128xbf16, #tpu.memory_space<vmem>>, vector<128x128xbf16>
    %cst_32 = arith.constant dense<0.000000e+00> : vector<8x128xf32>
    %71 = tpu.matmul %69, %70, %cst_32 {dimension_numbers = #tpu.dot_dimension_numbers<[1], [0], [0], [1], [0, 0, 1, 1], [], []>} : vector<8x128xbf16>, vector<128x128xbf16>, vector<8x128xf32> -> vector<8x128xf32>
    %c4 = arith.constant 4 : index
    %c0_33 = arith.constant 0 : index
    %72 = vector.load %arg4[%c4, %c0_33] : memref<8x128xf32, #tpu.memory_space<vmem>>, vector<1x128xf32>
    %73 = vector.broadcast %72 : vector<1x128xf32> to vector<8x128xf32>
    %74 = arith.addf %71, %73 : vector<8x128xf32>
    %c768 = arith.constant 768 : index
    %c0_34 = arith.constant 0 : index
    %75 = vector.load %arg3[%c768, %c0_34] : memref<1024x128xbf16, #tpu.memory_space<vmem>>, vector<16x128xbf16>
    %76 = arith.truncf %68 : vector<8x16xf32> to vector<8x16xbf16>
    %cst_35 = arith.constant dense<0.000000e+00> : vector<8x128xf32>
    %77 = tpu.matmul %76, %75, %cst_35 {dimension_numbers = #tpu.dot_dimension_numbers<[1], [0], [0], [1], [0, 0, 1, 1], [], []>} : vector<8x16xbf16>, vector<16x128xbf16>, vector<8x128xf32> -> vector<8x128xf32>
    %c5 = arith.constant 5 : index
    %c0_36 = arith.constant 0 : index
    %78 = vector.load %arg4[%c5, %c0_36] : memref<8x128xf32, #tpu.memory_space<vmem>>, vector<1x128xf32>
    %79 = vector.broadcast %78 : vector<1x128xf32> to vector<8x128xf32>
    %80 = arith.addf %77, %79 : vector<8x128xf32>
    %cst_37 = arith.constant 0.000000e+00 : f32
    %81 = vector.broadcast %cst_37 : f32 to vector<8x128xf32>
    %82 = arith.maximumf %80, %81 : vector<8x128xf32>
    %83 = arith.truncf %82 : vector<8x128xf32> to vector<8x128xbf16>
    %c896 = arith.constant 896 : index
    %c0_38 = arith.constant 0 : index
    %84 = vector.load %arg3[%c896, %c0_38] : memref<1024x128xbf16, #tpu.memory_space<vmem>>, vector<128x128xbf16>
    %cst_39 = arith.constant dense<0.000000e+00> : vector<8x128xf32>
    %85 = tpu.matmul %83, %84, %cst_39 {dimension_numbers = #tpu.dot_dimension_numbers<[1], [0], [0], [1], [0, 0, 1, 1], [], []>} : vector<8x128xbf16>, vector<128x128xbf16>, vector<8x128xf32> -> vector<8x128xf32>
    %c6 = arith.constant 6 : index
    %c0_40 = arith.constant 0 : index
    %86 = vector.load %arg4[%c6, %c0_40] : memref<8x128xf32, #tpu.memory_space<vmem>>, vector<1x128xf32>
    %87 = vector.broadcast %86 : vector<1x128xf32> to vector<8x128xf32>
    %88 = arith.addf %85, %87 : vector<8x128xf32>
    %c0_41 = arith.constant 0 : index
    %c0_42 = arith.constant 0 : index
    %89 = vector.load %arg5[%c0_41, %c0_42] : memref<8x896xf32, #tpu.memory_space<vmem>>, vector<8x128xf32>
    tpu.vector_store %arg5[%c0_41, %c0_42], %13 {strides = array<i32>} : memref<8x896xf32, #tpu.memory_space<vmem>>, vector<8x128xf32>,
    %c0_43 = arith.constant 0 : index
    %c128_44 = arith.constant 128 : index
    %90 = vector.load %arg5[%c0_43, %c128_44] : memref<8x896xf32, #tpu.memory_space<vmem>>, vector<8x128xf32>
    tpu.vector_store %arg5[%c0_43, %c128_44], %22 {strides = array<i32>} : memref<8x896xf32, #tpu.memory_space<vmem>>, vector<8x128xf32>,
    %c0_45 = arith.constant 0 : index
    %c256_46 = arith.constant 256 : index
    %91 = vector.load %arg5[%c0_45, %c256_46] : memref<8x896xf32, #tpu.memory_space<vmem>>, vector<8x128xf32>
    tpu.vector_store %arg5[%c0_45, %c256_46], %43 {strides = array<i32>} : memref<8x896xf32, #tpu.memory_space<vmem>>, vector<8x128xf32>,
    %c0_47 = arith.constant 0 : index
    %c384_48 = arith.constant 384 : index
    %92 = vector.load %arg5[%c0_47, %c384_48] : memref<8x896xf32, #tpu.memory_space<vmem>>, vector<8x128xf32>
    tpu.vector_store %arg5[%c0_47, %c384_48], %60 {strides = array<i32>} : memref<8x896xf32, #tpu.memory_space<vmem>>, vector<8x128xf32>,
    %c0_49 = arith.constant 0 : index
    %c512_50 = arith.constant 512 : index
    %93 = vector.load %arg5[%c0_49, %c512_50] : memref<8x896xf32, #tpu.memory_space<vmem>>, vector<8x128xf32>
    tpu.vector_store %arg5[%c0_49, %c512_50], %74 {strides = array<i32>} : memref<8x896xf32, #tpu.memory_space<vmem>>, vector<8x128xf32>,
    %c0_51 = arith.constant 0 : index
    %c640_52 = arith.constant 640 : index
    %94 = vector.load %arg5[%c0_51, %c640_52] : memref<8x896xf32, #tpu.memory_space<vmem>>, vector<8x16xf32>
    tpu.vector_store %arg5[%c0_51, %c640_52], %68 {strides = array<i32>} : memref<8x896xf32, #tpu.memory_space<vmem>>, vector<8x16xf32>,
    %c0_53 = arith.constant 0 : index
    %c768_54 = arith.constant 768 : index
    %95 = vector.load %arg5[%c0_53, %c768_54] : memref<8x896xf32, #tpu.memory_space<vmem>>, vector<8x128xf32>
    tpu.vector_store %arg5[%c0_53, %c768_54], %88 {strides = array<i32>} : memref<8x896xf32, #tpu.memory_space<vmem>>, vector<8x128xf32>,
    return
  }
}

</mosaic_0001>

<llo_original>
// kernel: tpu_custom_call.1
$region0: #{tpu_custom_call.1}
  #allocation0 [shape = 'u32[]', space=smem, size = 0x4, offset = 0x4, fixed_abs, tag = 'smem constant byte address 0x4 - core index']
  #allocation1 [shape = 'u32[144,128]{1,0:T(1,128)}', space=vmem, size = 0x12000, scoped, tag = 'internal scratch']
  %s0 = inlined_call_operand.hbm [shape: bf16[8,128], index: 0, kind: input, shape index: {}]
  %s1 = inlined_call_operand.hbm [shape: f32[8,128], index: 1, kind: input, shape index: {}]
  %s2 = inlined_call_operand.hbm [shape: f32[8,128], index: 2, kind: input, shape index: {}]
  %s3 = inlined_call_operand.hbm [shape: bf16[1024,128], index: 3, kind: input, shape index: {}]
  %s4 = inlined_call_operand.hbm [shape: f32[8,128], index: 4, kind: input, shape index: {}]
  %s5 = inlined_call_operand.hbm [shape: f32[8,896], index: 5, kind: output, shape index: {}]
  %s6 = sld [smem:[#allocation0]]
  $region50: #{tpu_custom_call.1} parent=0
    _
  %s8 = ssub.s32 1, %s6
  %s9 = scalar_select 0, %s8, %s6
  $region1: #{tpu_custom_call.1} parent=0
    #allocation2 [shape = 'u8[2048]{0}', space=vmem, size = 0x800, scoped, tag = 'input window, operand 0, single buffered']
    #allocation3 [shape = 's32[1]{0}', space=sflag, size = 0x4, scoped, tag = 'scoped memory for tpu_custom_call.1']
    #allocation4 [shape = 's32[1]{0}', space=sflag, size = 0x4, scoped, tag = 'scoped memory for tpu_custom_call.1']
    #allocation5 [shape = 'u8[4096]{0}', space=vmem, size = 0x1000, scoped, tag = 'input window, operand 1, single buffered']
    #allocation6 [shape = 's32[1]{0}', space=sflag, size = 0x4, scoped, tag = 'scoped memory for tpu_custom_call.1']
    #allocation7 [shape = 'u8[4096]{0}', space=vmem, size = 0x1000, scoped, tag = 'input window, operand 2, single buffered']
    #allocation8 [shape = 'u8[262144]{0}', space=vmem, size = 0x40000, scoped, tag = 'input window, operand 3, single buffered']
    #allocation9 [shape = 's32[1]{0}', space=sflag, size = 0x4, scoped, tag = 'scoped memory for tpu_custom_call.1']
    #allocation10 [shape = 'u8[4096]{0}', space=vmem, size = 0x1000, scoped, tag = 'input window, operand 4, single buffered']
    #allocation11 [shape = 'u8[28672]{0}', space=vmem, size = 0x7000, scoped, tag = 'output window, operand 0, single buffered']
    %10 = vsyncpa [#allocation3], 0
    %11 = vsyncpa [#allocation6], 0
    %12 = vsyncpa [#allocation9], 0
    %13 = vsyncpa [#allocation4], 0
    // Predicated region
    $region2: #{tpu_custom_call.1} parent=1 // pred_check
      _
    $region3: #{tpu_custom_call.1} parent=1 // pred_check_branch
      %15 = sbr.rel (0) target = $region5
    $region4: #{tpu_custom_call.1} parent=1 // pred_region
      %s17 = ssub.s32 64, 64
      %18 = vsyncadd [#allocation3], %s17
      %s20 = sshll.u32 [#allocation2], 4
      %s21 = int_to_ptr.vmem [resolvable:$true] %s20
      %23 = dma.hbm_to_vmem [thread:$0]  %s0, 64, %s21, [#allocation3]
    $region5: #{tpu_custom_call.1} parent=1 // pred_fallthru
      _
    // Predicated region
    $region6: #{tpu_custom_call.1} parent=1 // pred_check
      _
    $region7: #{tpu_custom_call.1} parent=1 // pred_check_branch
      %25 = sbr.rel (0) target = $region9
    $region8: #{tpu_custom_call.1} parent=1 // pred_region
      %s27 = ssub.s32 128, 128
      %28 = vsyncadd [#allocation6], %s27
      %s30 = sshll.u32 [#allocation5], 4
      %s31 = int_to_ptr.vmem [resolvable:$true] %s30
      %33 = dma.hbm_to_vmem [thread:$0]  %s1, 128, %s31, [#allocation6]
    $region9: #{tpu_custom_call.1} parent=1 // pred_fallthru
      _
    // Predicated region
    $region10: #{tpu_custom_call.1} parent=1 // pred_check
      _
    $region11: #{tpu_custom_call.1} parent=1 // pred_check_branch
      %35 = sbr.rel (0) target = $region13
    $region12: #{tpu_custom_call.1} parent=1 // pred_region
      %s37 = ssub.s32 128, 128
      %38 = vsyncadd [#allocation6], %s37
      %s40 = sshll.u32 [#allocation7], 4
      %s41 = int_to_ptr.vmem [resolvable:$true] %s40
      %43 = dma.hbm_to_vmem [thread:$0]  %s2, 128, %s41, [#allocation6]
    $region13: #{tpu_custom_call.1} parent=1 // pred_fallthru
      _
    // Predicated region
    $region14: #{tpu_custom_call.1} parent=1 // pred_check
      _
    $region15: #{tpu_custom_call.1} parent=1 // pred_check_branch
      %45 = sbr.rel (0) target = $region17
    $region16: #{tpu_custom_call.1} parent=1 // pred_region
      %s47 = ssub.s32 8192, 8192
      %48 = vsyncadd [#allocation9], %s47
      %s49 = sshll.u32 [#allocation8], 4
      %s50 = int_to_ptr.vmem [resolvable:$true] %s49
      %55 = dma.hbm_to_vmem [thread:$0]  %s3, 8192, %s50, [#allocation9], 64, 64, 4
    $region17: #{tpu_custom_call.1} parent=1 // pred_fallthru
      _
    // Predicated region
    $region18: #{tpu_custom_call.1} parent=1 // pred_check
      _
    $region19: #{tpu_custom_call.1} parent=1 // pred_check_branch
      %57 = sbr.rel (0) target = $region21
    $region20: #{tpu_custom_call.1} parent=1 // pred_region
      %s59 = ssub.s32 128, 128
      %60 = vsyncadd [#allocation9], %s59
      %s62 = sshll.u32 [#allocation10], 4
      %s63 = int_to_ptr.vmem [resolvable:$true] %s62
      %65 = dma.hbm_to_vmem [thread:$0]  %s4, 128, %s63, [#allocation9]
    $region21: #{tpu_custom_call.1} parent=1 // pred_fallthru
      _
    // Predicated region
    $region22: #{tpu_custom_call.1} parent=1 // pred_check
      _
    $region23: #{tpu_custom_call.1} parent=1 // pred_check_branch
      %67 = sbr.rel (0) target = $region25
    $region24: #{tpu_custom_call.1} parent=1 // pred_region
      %68 = dma.done [#allocation3], 64
    $region25: #{tpu_custom_call.1} parent=1 // pred_fallthru
      _
    // Predicated region
    $region26: #{tpu_custom_call.1} parent=1 // pred_check
      _
    $region27: #{tpu_custom_call.1} parent=1 // pred_check_branch
      %70 = sbr.rel (0) target = $region29
    $region28: #{tpu_custom_call.1} parent=1 // pred_region
      %71 = dma.done [#allocation6], 128
    $region29: #{tpu_custom_call.1} parent=1 // pred_fallthru
      _
    // Predicated region
    $region30: #{tpu_custom_call.1} parent=1 // pred_check
      _
    $region31: #{tpu_custom_call.1} parent=1 // pred_check_branch
      %73 = sbr.rel (0) target = $region33
    $region32: #{tpu_custom_call.1} parent=1 // pred_region
      %74 = dma.done [#allocation6], 128
    $region33: #{tpu_custom_call.1} parent=1 // pred_fallthru
      _
    // Predicated region
    $region34: #{tpu_custom_call.1} parent=1 // pred_check
      _
    $region35: #{tpu_custom_call.1} parent=1 // pred_check_branch
      %76 = sbr.rel (0) target = $region37
    $region36: #{tpu_custom_call.1} parent=1 // pred_region
      %77 = dma.done [#allocation9], 8192
    $region37: #{tpu_custom_call.1} parent=1 // pred_fallthru
      _
    // Predicated region
    $region38: #{tpu_custom_call.1} parent=1 // pred_check
      _
    $region39: #{tpu_custom_call.1} parent=1 // pred_check_branch
      %79 = sbr.rel (0) target = $region41
    $region40: #{tpu_custom_call.1} parent=1 // pred_region
      %80 = dma.done [#allocation9], 128
    $region41: #{tpu_custom_call.1} parent=1 // pred_fallthru
      _
    %v82 = vld [vmem:[#allocation2] sm:$0xf]
    %v83 = vld [vmem:[#allocation8] sm:$0xf]
    %v84 = vld [vmem:[#allocation8 + $0x4] sm:$0xf]
    %v85 = vld [vmem:[#allocation8 + $0x8] sm:$0xf]
    %v86 = vld [vmem:[#allocation8 + $0xc] sm:$0xf]
    %v87 = vld [vmem:[#allocation8 + $0x10] sm:$0xf]
    %v88 = vld [vmem:[#allocation8 + $0x14] sm:$0xf]
    %v89 = vld [vmem:[#allocation8 + $0x18] sm:$0xf]
    %v90 = vld [vmem:[#allocation8 + $0x1c] sm:$0xf]
    %v91 = vld [vmem:[#allocation8 + $0x20] sm:$0xf]
    %v92 = vld [vmem:[#allocation8 + $0x24] sm:$0xf]
    %v93 = vld [vmem:[#allocation8 + $0x28] sm:$0xf]
    %v94 = vld [vmem:[#allocation8 + $0x2c] sm:$0xf]
    %v95 = vld [vmem:[#allocation8 + $0x30] sm:$0xf]
    %v96 = vld [vmem:[#allocation8 + $0x34] sm:$0xf]
    %v97 = vld [vmem:[#allocation8 + $0x38] sm:$0xf]
    %v98 = vld [vmem:[#allocation8 + $0x3c] sm:$0xf]
    %v99 = vld [vmem:[#allocation10] sm:$0x1]
    %v100 = vlaneseq
    %v101 = vshrl.u32 %v100, 7
    %v102 = vsub.s32 0, %v101
    %v103 = vrot.slane %v99, %v102
    %v120 = vunpack.c.l.b16 %v83
    %v121 = vunpack.c.l.b16 %v84
    %v122 = vunpack.c.l.b16 %v85
    %v123 = vunpack.c.l.b16 %v86
    %v124 = vunpack.c.l.b16 %v87
    %v125 = vunpack.c.l.b16 %v88
    %v126 = vunpack.c.l.b16 %v89
    %v127 = vunpack.c.l.b16 %v90
    %v128 = vunpack.c.l.b16 %v91
    %v129 = vunpack.c.l.b16 %v92
    %v130 = vunpack.c.l.b16 %v93
    %v131 = vunpack.c.l.b16 %v94
    %v132 = vunpack.c.l.b16 %v95
    %v133 = vunpack.c.l.b16 %v96
    %v134 = vunpack.c.l.b16 %v97
    %v135 = vunpack.c.l.b16 %v98
    %v136 = vpack.c.b16 %v121, %v120
    %v137 = vpack.c.b16 %v123, %v122
    %v138 = vpack.c.b16 %v125, %v124
    %v139 = vpack.c.b16 %v127, %v126
    %v140 = vpack.c.b16 %v129, %v128
    %v141 = vpack.c.b16 %v131, %v130
    %v142 = vpack.c.b16 %v133, %v132
    %v143 = vpack.c.b16 %v135, %v134
    %152 = vmatprep.subr.bf16.mxu0 0
    %153 = vmatpush1.bf16.msra.mxu0 %v143
    %154 = vmatprep.subr.bf16.mxu0 0
    %155 = vmatpush1.bf16.msra.mxu0 %v142
    %156 = vmatprep.subr.bf16.mxu0 0
    %157 = vmatpush1.bf16.msra.mxu0 %v141
    %158 = vmatprep.subr.bf16.mxu0 0
    %159 = vmatpush1.bf16.msra.mxu0 %v140
    %160 = vmatprep.subr.bf16.mxu0 0
    %161 = vmatpush1.bf16.msra.mxu0 %v139
    %162 = vmatprep.subr.bf16.mxu0 0
    %163 = vmatpush1.bf16.msra.mxu0 %v138
    %164 = vmatprep.subr.bf16.mxu0 0
    %165 = vmatpush1.bf16.msra.mxu0 %v137
    %166 = vmatprep.subr.bf16.mxu0 0
    %167 = vmatpush1.bf16.msra.mxu0 %v136
    %168 = vmatprep.subr.bf16.mxu0 0
    %169 = vmatpush2.bf16.msra.mxu0 0
    %170 = vmatprep.subr.bf16.mxu0 0
    %171 = vmatpush2.bf16.msra.mxu0 0
    %172 = vmatprep.subr.bf16.mxu0 0
    %173 = vmatpush2.bf16.msra.mxu0 0
    %174 = vmatprep.subr.bf16.mxu0 0
    %175 = vmatpush2.bf16.msra.mxu0 0
    %176 = vmatprep.subr.bf16.mxu0 0
    %177 = vmatpush2.bf16.msra.mxu0 0
    %178 = vmatprep.subr.bf16.mxu0 0
    %179 = vmatpush2.bf16.msra.mxu0 0
    %180 = vmatprep.subr.bf16.mxu0 0
    %181 = vmatpush2.bf16.msra.mxu0 0
    %182 = vmatprep.subr.bf16.mxu0 0
    %183 = vmatpush2.bf16.msra.mxu0 0
    %184 = vmatprep.mubr.bf16.mxu0 0
    %185 = vmatmul.mubr.bf16.gmra.mxu0 %v82
    %v186 = vpop.f32.mrf.mxu0
    %v187 = vadd.f32 %v103, %v186
    %v188 = vpop.f32.mrf.mxu0
    %v189 = vpop.f32.mrf.mxu0
    %v190 = vpop.f32.mrf.mxu0
    %191 = vdwg.mxu0
    %v192 = vmax.f32 %v187, 0.0
    %v193 = vpack.c.bf16 %v192, %v192
    %v194 = vld [vmem:[#allocation8 + $0x40] sm:$0xf]
    %v195 = vld [vmem:[#allocation8 + $0x44] sm:$0xf]
    %v196 = vld [vmem:[#allocation8 + $0x48] sm:$0xf]
    %v197 = vld [vmem:[#allocation8 + $0x4c] sm:$0xf]
    %v198 = vld [vmem:[#allocation8 + $0x50] sm:$0xf]
    %v199 = vld [vmem:[#allocation8 + $0x54] sm:$0xf]
    %v200 = vld [vmem:[#allocation8 + $0x58] sm:$0xf]
    %v201 = vld [vmem:[#allocation8 + $0x5c] sm:$0xf]
    %v202 = vld [vmem:[#allocation8 + $0x60] sm:$0xf]
    %v203 = vld [vmem:[#allocation8 + $0x64] sm:$0xf]
    %v204 = vld [vmem:[#allocation8 + $0x68] sm:$0xf]
    %v205 = vld [vmem:[#allocation8 + $0x6c] sm:$0xf]
    %v206 = vld [vmem:[#allocation8 + $0x70] sm:$0xf]
    %v207 = vld [vmem:[#allocation8 + $0x74] sm:$0xf]
    %v208 = vld [vmem:[#allocation8 + $0x78] sm:$0xf]
    %v209 = vld [vmem:[#allocation8 + $0x7c] sm:$0xf]
    %v210 = vld [vmem:[#allocation10 + $0x1] sm:$0x1]
    %v211 = vlaneseq
    %v212 = vshrl.u32 %v211, 7
    %v213 = vsub.s32 0, %v212
    %v214 = vrot.slane %v210, %v213
    %v231 = vunpack.c.l.b16 %v194
    %v232 = vunpack.c.l.b16 %v195
    %v233 = vunpack.c.l.b16 %v196
    %v234 = vunpack.c.l.b16 %v197
    %v235 = vunpack.c.l.b16 %v198
    %v236 = vunpack.c.l.b16 %v199
    %v237 = vunpack.c.l.b16 %v200
    %v238 = vunpack.c.l.b16 %v201
    %v239 = vunpack.c.l.b16 %v202
    %v240 = vunpack.c.l.b16 %v203
    %v241 = vunpack.c.l.b16 %v204
    %v242 = vunpack.c.l.b16 %v205
    %v243 = vunpack.c.l.b16 %v206
    %v244 = vunpack.c.l.b16 %v207
    %v245 = vunpack.c.l.b16 %v208
    %v246 = vunpack.c.l.b16 %v209
    %v247 = vpack.c.b16 %v232, %v231
    %v248 = vpack.c.b16 %v234, %v233
    %v249 = vpack.c.b16 %v236, %v235
    %v250 = vpack.c.b16 %v238, %v237
    %v251 = vpack.c.b16 %v240, %v239
    %v252 = vpack.c.b16 %v242, %v241
    %v253 = vpack.c.b16 %v244, %v243
    %v254 = vpack.c.b16 %v246, %v245
    %263 = vmatprep.subr.bf16.mxu0 0
    %264 = vmatpush1.bf16.msra.mxu0 %v254
    %265 = vmatprep.subr.bf16.mxu0 0
    %266 = vmatpush1.bf16.msra.mxu0 %v253
    %267 = vmatprep.subr.bf16.mxu0 0
    %268 = vmatpush1.bf16.msra.mxu0 %v252
    %269 = vmatprep.subr.bf16.mxu0 0
    %270 = vmatpush1.bf16.msra.mxu0 %v251
    %271 = vmatprep.subr.bf16.mxu0 0
    %272 = vmatpush1.bf16.msra.mxu0 %v250
    %273 = vmatprep.subr.bf16.mxu0 0
    %274 = vmatpush1.bf16.msra.mxu0 %v249
    %275 = vmatprep.subr.bf16.mxu0 0
    %276 = vmatpush1.bf16.msra.mxu0 %v248
    %277 = vmatprep.subr.bf16.mxu0 0
    %278 = vmatpush1.bf16.msra.mxu0 %v247
    %279 = vmatprep.subr.bf16.mxu0 0
    %280 = vmatpush2.bf16.msra.mxu0 0
    %281 = vmatprep.subr.bf16.mxu0 0
    %282 = vmatpush2.bf16.msra.mxu0 0
    %283 = vmatprep.subr.bf16.mxu0 0
    %284 = vmatpush2.bf16.msra.mxu0 0
    %285 = vmatprep.subr.bf16.mxu0 0
    %286 = vmatpush2.bf16.msra.mxu0 0
    %287 = vmatprep.subr.bf16.mxu0 0
    %288 = vmatpush2.bf16.msra.mxu0 0
    %289 = vmatprep.subr.bf16.mxu0 0
    %290 = vmatpush2.bf16.msra.mxu0 0
    %291 = vmatprep.subr.bf16.mxu0 0
    %292 = vmatpush2.bf16.msra.mxu0 0
    %293 = vmatprep.subr.bf16.mxu0 0
    %294 = vmatpush2.bf16.msra.mxu0 0
    %295 = vmatprep.mubr.bf16.mxu0 0
    %296 = vmatmul.mubr.bf16.gmra.mxu0 %v193
    %v297 = vpop.f32.mrf.mxu0
    %v298 = vadd.f32 %v214, %v297
    %v299 = vpop.f32.mrf.mxu0
    %v300 = vpop.f32.mrf.mxu0
    %v301 = vpop.f32.mrf.mxu0
    %302 = vdwg.mxu0
    %303 = vmax.xlane.f32.xlu0 %v298
    %v304 = vpop.xlane.xlu0 %303
    %v305 = vsub.f32 %v298, %v304
    %v306 = vmul.f32 %v305, 1.442695
    %v307 = vpow.pop %v306
    %308 = vadd.xlane.f32.xlu0 %v307
    %v309 = vpop.xlane.xlu0 %308
    %v310 = vrcp.pop %v309
    %v311 = vmul.f32 %v307, %v310
    %v312 = vld [vmem:[#allocation5] sm:$0xff]
    %v313 = vmax.f32 %v312, 1e-07
    %v314 = vmin.f32 %v313, 0.9999999
    %v315 = vlog2.pop %v314
    %v316 = vmul.f32 %v315, 0.6931472
    %v317 = vsub.f32 0.0, %v316
    %v318 = vlog2.pop %v317
    %v319 = vmul.f32 %v318, 0.6931472
    %v320 = vsub.f32 %v298, %v319
    %321 = vmax.xlane.f32.xlu0 %v320
    %v322 = vpop.xlane.xlu0 %321
    %v323 = vsub.f32 %v320, %v322
    %v324 = vmul.f32 %v323, 1.442695
    %v325 = vpow.pop %v324
    %326 = vadd.xlane.f32.xlu0 %v325
    %v327 = vpop.xlane.xlu0 %326
    %v328 = vrcp.pop %v327
    %v329 = vmul.f32 %v325, %v328
    %v330 = vld [vmem:[#allocation8 + $0x80] sm:$0xf]
    %v331 = vld [vmem:[#allocation8 + $0x84] sm:$0xf]
    %v332 = vld [vmem:[#allocation8 + $0x88] sm:$0xf]
    %v333 = vld [vmem:[#allocation8 + $0x8c] sm:$0xf]
    %v334 = vld [vmem:[#allocation8 + $0x90] sm:$0xf]
    %v335 = vld [vmem:[#allocation8 + $0x94] sm:$0xf]
    %v336 = vld [vmem:[#allocation8 + $0x98] sm:$0xf]
    %v337 = vld [vmem:[#allocation8 + $0x9c] sm:$0xf]
    %v338 = vld [vmem:[#allocation8 + $0xa0] sm:$0xf]
    %v339 = vld [vmem:[#allocation8 + $0xa4] sm:$0xf]
    %v340 = vld [vmem:[#allocation8 + $0xa8] sm:$0xf]
    %v341 = vld [vmem:[#allocation8 + $0xac] sm:$0xf]
    %v342 = vld [vmem:[#allocation8 + $0xb0] sm:$0xf]
    %v343 = vld [vmem:[#allocation8 + $0xb4] sm:$0xf]
    %v344 = vld [vmem:[#allocation8 + $0xb8] sm:$0xf]
    %v345 = vld [vmem:[#allocation8 + $0xbc] sm:$0xf]
    %v346 = vpack.c.bf16 %v329, %v329
    %v347 = vld [vmem:[#allocation8 + $0xc0] sm:$0xf]
    %v348 = vld [vmem:[#allocation8 + $0xc4] sm:$0xf]
    %v349 = vld [vmem:[#allocation8 + $0xc8] sm:$0xf]
    %v350 = vld [vmem:[#allocation8 + $0xcc] sm:$0xf]
    %v351 = vld [vmem:[#allocation8 + $0xd0] sm:$0xf]
    %v352 = vld [vmem:[#allocation8 + $0xd4] sm:$0xf]
    %v353 = vld [vmem:[#allocation8 + $0xd8] sm:$0xf]
    %v354 = vld [vmem:[#allocation8 + $0xdc] sm:$0xf]
    %v355 = vld [vmem:[#allocation8 + $0xe0] sm:$0xf]
    %v356 = vld [vmem:[#allocation8 + $0xe4] sm:$0xf]
    %v357 = vld [vmem:[#allocation8 + $0xe8] sm:$0xf]
    %v358 = vld [vmem:[#allocation8 + $0xec] sm:$0xf]
    %v359 = vld [vmem:[#allocation8 + $0xf0] sm:$0xf]
    %v360 = vld [vmem:[#allocation8 + $0xf4] sm:$0xf]
    %v361 = vld [vmem:[#allocation8 + $0xf8] sm:$0xf]
    %v362 = vld [vmem:[#allocation8 + $0xfc] sm:$0xf]
    %v379 = vunpack.c.l.b16 %v347
    %v380 = vunpack.c.l.b16 %v348
    %v381 = vunpack.c.l.b16 %v349
    %v382 = vunpack.c.l.b16 %v350
    %v383 = vunpack.c.l.b16 %v351
    %v384 = vunpack.c.l.b16 %v352
    %v385 = vunpack.c.l.b16 %v353
    %v386 = vunpack.c.l.b16 %v354
    %v387 = vunpack.c.l.b16 %v355
    %v388 = vunpack.c.l.b16 %v356
    %v389 = vunpack.c.l.b16 %v357
    %v390 = vunpack.c.l.b16 %v358
    %v391 = vunpack.c.l.b16 %v359
    %v392 = vunpack.c.l.b16 %v360
    %v393 = vunpack.c.l.b16 %v361
    %v394 = vunpack.c.l.b16 %v362
    %v395 = vpack.c.b16 %v380, %v379
    %v396 = vpack.c.b16 %v382, %v381
    %v397 = vpack.c.b16 %v384, %v383
    %v398 = vpack.c.b16 %v386, %v385
    %v399 = vpack.c.b16 %v388, %v387
    %v400 = vpack.c.b16 %v390, %v389
    %v401 = vpack.c.b16 %v392, %v391
    %v402 = vpack.c.b16 %v394, %v393
    %411 = vmatprep.subr.bf16.mxu0 0
    %412 = vmatpush1.bf16.msra.mxu0 %v402
    %413 = vmatprep.subr.bf16.mxu0 0
    %414 = vmatpush1.bf16.msra.mxu0 %v401
    %415 = vmatprep.subr.bf16.mxu0 0
    %416 = vmatpush1.bf16.msra.mxu0 %v400
    %417 = vmatprep.subr.bf16.mxu0 0
    %418 = vmatpush1.bf16.msra.mxu0 %v399
    %419 = vmatprep.subr.bf16.mxu0 0
    %420 = vmatpush1.bf16.msra.mxu0 %v398
    %421 = vmatprep.subr.bf16.mxu0 0
    %422 = vmatpush1.bf16.msra.mxu0 %v397
    %423 = vmatprep.subr.bf16.mxu0 0
    %424 = vmatpush1.bf16.msra.mxu0 %v396
    %425 = vmatprep.subr.bf16.mxu0 0
    %426 = vmatpush1.bf16.msra.mxu0 %v395
    %427 = vmatprep.subr.bf16.mxu0 0
    %428 = vmatpush2.bf16.msra.mxu0 0
    %429 = vmatprep.subr.bf16.mxu0 0
    %430 = vmatpush2.bf16.msra.mxu0 0
    %431 = vmatprep.subr.bf16.mxu0 0
    %432 = vmatpush2.bf16.msra.mxu0 0
    %433 = vmatprep.subr.bf16.mxu0 0
    %434 = vmatpush2.bf16.msra.mxu0 0
    %435 = vmatprep.subr.bf16.mxu0 0
    %436 = vmatpush2.bf16.msra.mxu0 0
    %437 = vmatprep.subr.bf16.mxu0 0
    %438 = vmatpush2.bf16.msra.mxu0 0
    %439 = vmatprep.subr.bf16.mxu0 0
    %440 = vmatpush2.bf16.msra.mxu0 0
    %441 = vmatprep.subr.bf16.mxu0 0
    %442 = vmatpush2.bf16.msra.mxu0 0
    %443 = vmatprep.mubr.bf16.mxu0 0
    %444 = vmatmul.mubr.bf16.gmra.mxu0 %v346
    %v445 = vpop.f32.mrf.mxu0
    %v446 = vadd.f32 0.0, %v445
    %v447 = vpop.f32.mrf.mxu0
    %v448 = vpop.f32.mrf.mxu0
    %v449 = vpop.f32.mrf.mxu0
    %450 = vdwg.mxu0
    %v467 = vunpack.c.l.b16 %v330
    %v468 = vunpack.c.l.b16 %v331
    %v469 = vunpack.c.l.b16 %v332
    %v470 = vunpack.c.l.b16 %v333
    %v471 = vunpack.c.l.b16 %v334
    %v472 = vunpack.c.l.b16 %v335
    %v473 = vunpack.c.l.b16 %v336
    %v474 = vunpack.c.l.b16 %v337
    %v475 = vunpack.c.l.b16 %v338
    %v476 = vunpack.c.l.b16 %v339
    %v477 = vunpack.c.l.b16 %v340
    %v478 = vunpack.c.l.b16 %v341
    %v479 = vunpack.c.l.b16 %v342
    %v480 = vunpack.c.l.b16 %v343
    %v481 = vunpack.c.l.b16 %v344
    %v482 = vunpack.c.l.b16 %v345
    %v483 = vpack.c.b16 %v468, %v467
    %v484 = vpack.c.b16 %v470, %v469
    %v485 = vpack.c.b16 %v472, %v471
    %v486 = vpack.c.b16 %v474, %v473
    %v487 = vpack.c.b16 %v476, %v475
    %v488 = vpack.c.b16 %v478, %v477
    %v489 = vpack.c.b16 %v480, %v479
    %v490 = vpack.c.b16 %v482, %v481
    %499 = vmatprep.subr.bf16.mxu0 0
    %500 = vmatpush1.bf16.msra.mxu0 %v490
    %501 = vmatprep.subr.bf16.mxu0 0
    %502 = vmatpush1.bf16.msra.mxu0 %v489
    %503 = vmatprep.subr.bf16.mxu0 0
    %504 = vmatpush1.bf16.msra.mxu0 %v488
    %505 = vmatprep.subr.bf16.mxu0 0
    %506 = vmatpush1.bf16.msra.mxu0 %v487
    %507 = vmatprep.subr.bf16.mxu0 0
    %508 = vmatpush1.bf16.msra.mxu0 %v486
    %509 = vmatprep.subr.bf16.mxu0 0
    %510 = vmatpush1.bf16.msra.mxu0 %v485
    %511 = vmatprep.subr.bf16.mxu0 0
    %512 = vmatpush1.bf16.msra.mxu0 %v484
    %513 = vmatprep.subr.bf16.mxu0 0
    %514 = vmatpush1.bf16.msra.mxu0 %v483
    %515 = vmatprep.subr.bf16.mxu0 0
    %516 = vmatpush2.bf16.msra.mxu0 0
    %517 = vmatprep.subr.bf16.mxu0 0
    %518 = vmatpush2.bf16.msra.mxu0 0
    %519 = vmatprep.subr.bf16.mxu0 0
    %520 = vmatpush2.bf16.msra.mxu0 0
    %521 = vmatprep.subr.bf16.mxu0 0
    %522 = vmatpush2.bf16.msra.mxu0 0
    %523 = vmatprep.subr.bf16.mxu0 0
    %524 = vmatpush2.bf16.msra.mxu0 0
    %525 = vmatprep.subr.bf16.mxu0 0
    %526 = vmatpush2.bf16.msra.mxu0 0
    %527 = vmatprep.subr.bf16.mxu0 0
    %528 = vmatpush2.bf16.msra.mxu0 0
    %529 = vmatprep.subr.bf16.mxu0 0
    %530 = vmatpush2.bf16.msra.mxu0 0
    %531 = vmatprep.mubr.bf16.mxu0 0
    %532 = vmatmul.mubr.bf16.gmra.mxu0 %v82
    %v533 = vpop.f32.mrf.mxu0
    %v534 = vadd.f32 %v446, %v533
    %v535 = vpop.f32.mrf.mxu0
    %v536 = vpop.f32.mrf.mxu0
    %v537 = vpop.f32.mrf.mxu0
    %538 = vdwg.mxu0
    %v539 = vld [vmem:[#allocation10 + $0x2] sm:$0x1]
    %v540 = vlaneseq
    %v541 = vshrl.u32 %v540, 7
    %v542 = vsub.s32 0, %v541
    %v543 = vrot.slane %v539, %v542
    %v544 = vadd.f32 %v534, %v543
    %v545 = vmax.f32 %v544, 0.0
    %v546 = vpack.c.bf16 %v545, %v545
    %v547 = vld [vmem:[#allocation8 + $0x100] sm:$0xf]
    %v548 = vld [vmem:[#allocation8 + $0x104] sm:$0xf]
    %v549 = vld [vmem:[#allocation8 + $0x108] sm:$0xf]
    %v550 = vld [vmem:[#allocation8 + $0x10c] sm:$0xf]
    %v551 = vld [vmem:[#allocation8 + $0x110] sm:$0xf]
    %v552 = vld [vmem:[#allocation8 + $0x114] sm:$0xf]
    %v553 = vld [vmem:[#allocation8 + $0x118] sm:$0xf]
    %v554 = vld [vmem:[#allocation8 + $0x11c] sm:$0xf]
    %v555 = vld [vmem:[#allocation8 + $0x120] sm:$0xf]
    %v556 = vld [vmem:[#allocation8 + $0x124] sm:$0xf]
    %v557 = vld [vmem:[#allocation8 + $0x128] sm:$0xf]
    %v558 = vld [vmem:[#allocation8 + $0x12c] sm:$0xf]
    %v559 = vld [vmem:[#allocation8 + $0x130] sm:$0xf]
    %v560 = vld [vmem:[#allocation8 + $0x134] sm:$0xf]
    %v561 = vld [vmem:[#allocation8 + $0x138] sm:$0xf]
    %v562 = vld [vmem:[#allocation8 + $0x13c] sm:$0xf]
    %v563 = vld [vmem:[#allocation10 + $0x3] sm:$0x1]
    %v564 = vlaneseq
    %v565 = vshrl.u32 %v564, 7
    %v566 = vsub.s32 0, %v565
    %v567 = vrot.slane %v563, %v566
    %v584 = vunpack.c.l.b16 %v547
    %v585 = vunpack.c.l.b16 %v548
    %v586 = vunpack.c.l.b16 %v549
    %v587 = vunpack.c.l.b16 %v550
    %v588 = vunpack.c.l.b16 %v551
    %v589 = vunpack.c.l.b16 %v552
    %v590 = vunpack.c.l.b16 %v553
    %v591 = vunpack.c.l.b16 %v554
    %v592 = vunpack.c.l.b16 %v555
    %v593 = vunpack.c.l.b16 %v556
    %v594 = vunpack.c.l.b16 %v557
    %v595 = vunpack.c.l.b16 %v558
    %v596 = vunpack.c.l.b16 %v559
    %v597 = vunpack.c.l.b16 %v560
    %v598 = vunpack.c.l.b16 %v561
    %v599 = vunpack.c.l.b16 %v562
    %v600 = vpack.c.b16 %v585, %v584
    %v601 = vpack.c.b16 %v587, %v586
    %v602 = vpack.c.b16 %v589, %v588
    %v603 = vpack.c.b16 %v591, %v590
    %v604 = vpack.c.b16 %v593, %v592
    %v605 = vpack.c.b16 %v595, %v594
    %v606 = vpack.c.b16 %v597, %v596
    %v607 = vpack.c.b16 %v599, %v598
    %616 = vmatprep.subr.bf16.mxu0 0
    %617 = vmatpush1.bf16.msra.mxu0 %v607
    %618 = vmatprep.subr.bf16.mxu0 0
    %619 = vmatpush1.bf16.msra.mxu0 %v606
    %620 = vmatprep.subr.bf16.mxu0 0
    %621 = vmatpush1.bf16.msra.mxu0 %v605
    %622 = vmatprep.subr.bf16.mxu0 0
    %623 = vmatpush1.bf16.msra.mxu0 %v604
    %624 = vmatprep.subr.bf16.mxu0 0
    %625 = vmatpush1.bf16.msra.mxu0 %v603
    %626 = vmatprep.subr.bf16.mxu0 0
    %627 = vmatpush1.bf16.msra.mxu0 %v602
    %628 = vmatprep.subr.bf16.mxu0 0
    %629 = vmatpush1.bf16.msra.mxu0 %v601
    %630 = vmatprep.subr.bf16.mxu0 0
    %631 = vmatpush1.bf16.msra.mxu0 %v600
    %632 = vmatprep.subr.bf16.mxu0 0
    %633 = vmatpush2.bf16.msra.mxu0 0
    %634 = vmatprep.subr.bf16.mxu0 0
    %635 = vmatpush2.bf16.msra.mxu0 0
    %636 = vmatprep.subr.bf16.mxu0 0
    %637 = vmatpush2.bf16.msra.mxu0 0
    %638 = vmatprep.subr.bf16.mxu0 0
    %639 = vmatpush2.bf16.msra.mxu0 0
    %640 = vmatprep.subr.bf16.mxu0 0
    %641 = vmatpush2.bf16.msra.mxu0 0
    %642 = vmatprep.subr.bf16.mxu0 0
    %643 = vmatpush2.bf16.msra.mxu0 0
    %644 = vmatprep.subr.bf16.mxu0 0
    %645 = vmatpush2.bf16.msra.mxu0 0
    %646 = vmatprep.subr.bf16.mxu0 0
    %647 = vmatpush2.bf16.msra.mxu0 0
    %648 = vmatprep.mubr.bf16.mxu0 0
    %649 = vmatmul.mubr.bf16.gmra.mxu0 %v546
    %v650 = vpop.f32.mrf.mxu0
    %v651 = vadd.f32 %v567, %v650
    %v652 = vpop.f32.mrf.mxu0
    %v653 = vpop.f32.mrf.mxu0
    %v654 = vpop.f32.mrf.mxu0
    %655 = vdwg.mxu0
    %v656 = vmul.f32 %v651, 0.5
    %v657 = vmul.f32 %v656, 1.442695
    %v658 = vpow.pop %v657
    %v659 = vld [vmem:[#allocation7] sm:$0xff]
    %661 = vrot.lane.b32.xlu0 %v659, 16
    %v662 = vpop.permute.xlu0 %661
    %v664 = vmul.f32 %v658, %v662
    %666 = vrot.lane.b32.xlu0 %v664, 112
    %v667 = vpop.permute.xlu0 %666
    %v669 = vadd.f32 %v651, %v667
    %v670 = vld [vmem:[#allocation8 + $0x140] sm:$0xf]
    %v671 = vld [vmem:[#allocation8 + $0x144] sm:$0xf]
    %v672 = vld [vmem:[#allocation8 + $0x148] sm:$0xf]
    %v673 = vld [vmem:[#allocation8 + $0x14c] sm:$0xf]
    %v674 = vld [vmem:[#allocation8 + $0x150] sm:$0xf]
    %v675 = vld [vmem:[#allocation8 + $0x154] sm:$0xf]
    %v676 = vld [vmem:[#allocation8 + $0x158] sm:$0xf]
    %v677 = vld [vmem:[#allocation8 + $0x15c] sm:$0xf]
    %v678 = vld [vmem:[#allocation8 + $0x160] sm:$0xf]
    %v679 = vld [vmem:[#allocation8 + $0x164] sm:$0xf]
    %v680 = vld [vmem:[#allocation8 + $0x168] sm:$0xf]
    %v681 = vld [vmem:[#allocation8 + $0x16c] sm:$0xf]
    %v682 = vld [vmem:[#allocation8 + $0x170] sm:$0xf]
    %v683 = vld [vmem:[#allocation8 + $0x174] sm:$0xf]
    %v684 = vld [vmem:[#allocation8 + $0x178] sm:$0xf]
    %v685 = vld [vmem:[#allocation8 + $0x17c] sm:$0xf]
    %v686 = vld [vmem:[#allocation10 + $0x4] sm:$0x1]
    %v687 = vlaneseq
    %v688 = vshrl.u32 %v687, 7
    %v689 = vsub.s32 0, %v688
    %v690 = vrot.slane %v686, %v689
    %v707 = vunpack.c.l.b16 %v670
    %v708 = vunpack.c.l.b16 %v671
    %v709 = vunpack.c.l.b16 %v672
    %v710 = vunpack.c.l.b16 %v673
    %v711 = vunpack.c.l.b16 %v674
    %v712 = vunpack.c.l.b16 %v675
    %v713 = vunpack.c.l.b16 %v676
    %v714 = vunpack.c.l.b16 %v677
    %v715 = vunpack.c.l.b16 %v678
    %v716 = vunpack.c.l.b16 %v679
    %v717 = vunpack.c.l.b16 %v680
    %v718 = vunpack.c.l.b16 %v681
    %v719 = vunpack.c.l.b16 %v682
    %v720 = vunpack.c.l.b16 %v683
    %v721 = vunpack.c.l.b16 %v684
    %v722 = vunpack.c.l.b16 %v685
    %v723 = vpack.c.b16 %v708, %v707
    %v724 = vpack.c.b16 %v710, %v709
    %v725 = vpack.c.b16 %v712, %v711
    %v726 = vpack.c.b16 %v714, %v713
    %v727 = vpack.c.b16 %v716, %v715
    %v728 = vpack.c.b16 %v718, %v717
    %v729 = vpack.c.b16 %v720, %v719
    %v730 = vpack.c.b16 %v722, %v721
    %739 = vmatprep.subr.bf16.mxu0 0
    %740 = vmatpush1.bf16.msra.mxu0 %v730
    %741 = vmatprep.subr.bf16.mxu0 0
    %742 = vmatpush1.bf16.msra.mxu0 %v729
    %743 = vmatprep.subr.bf16.mxu0 0
    %744 = vmatpush1.bf16.msra.mxu0 %v728
    %745 = vmatprep.subr.bf16.mxu0 0
    %746 = vmatpush1.bf16.msra.mxu0 %v727
    %747 = vmatprep.subr.bf16.mxu0 0
    %748 = vmatpush1.bf16.msra.mxu0 %v726
    %749 = vmatprep.subr.bf16.mxu0 0
    %750 = vmatpush1.bf16.msra.mxu0 %v725
    %751 = vmatprep.subr.bf16.mxu0 0
    %752 = vmatpush1.bf16.msra.mxu0 %v724
    %753 = vmatprep.subr.bf16.mxu0 0
    %754 = vmatpush1.bf16.msra.mxu0 %v723
    %755 = vmatprep.subr.bf16.mxu0 0
    %756 = vmatpush2.bf16.msra.mxu0 0
    %757 = vmatprep.subr.bf16.mxu0 0
    %758 = vmatpush2.bf16.msra.mxu0 0
    %759 = vmatprep.subr.bf16.mxu0 0
    %760 = vmatpush2.bf16.msra.mxu0 0
    %761 = vmatprep.subr.bf16.mxu0 0
    %762 = vmatpush2.bf16.msra.mxu0 0
    %763 = vmatprep.subr.bf16.mxu0 0
    %764 = vmatpush2.bf16.msra.mxu0 0
    %765 = vmatprep.subr.bf16.mxu0 0
    %766 = vmatpush2.bf16.msra.mxu0 0
    %767 = vmatprep.subr.bf16.mxu0 0
    %768 = vmatpush2.bf16.msra.mxu0 0
    %769 = vmatprep.subr.bf16.mxu0 0
    %770 = vmatpush2.bf16.msra.mxu0 0
    %771 = vmatprep.mubr.bf16.mxu0 0
    %772 = vmatmul.mubr.bf16.gmra.mxu0 %v346
    %v773 = vpop.f32.mrf.mxu0
    %v774 = vadd.f32 %v690, %v773
    %v775 = vpop.f32.mrf.mxu0
    %v776 = vpop.f32.mrf.mxu0
    %v777 = vpop.f32.mrf.mxu0
    %778 = vdwg.mxu0
    %v779 = vld [vmem:[#allocation8 + $0x180] sm:$0xf]
    %v780 = vld [vmem:[#allocation8 + $0x184] sm:$0xf]
    %v781 = vpack.c.bf16 %v669, %v669
    %v782 = vld [vmem:[#allocation10 + $0x5] sm:$0x1]
    %v783 = vlaneseq
    %v784 = vshrl.u32 %v783, 7
    %v785 = vsub.s32 0, %v784
    %v786 = vrot.slane %v782, %v785
    %v789 = vunpack.c.l.b16 %v779
    %v790 = vunpack.c.l.b16 %v780
    %v791 = vpack.c.b16 %v790, %v789
    %vm793 = vcmask 130048
    %v795 = vsel %vm793, %v781, 0
    %797 = vmatprep.subr.bf16.mxu0 0
    %798 = vmatpush1.bf16.msra.mxu0 0
    %799 = vmatprep.subr.bf16.mxu0 0
    %800 = vmatpush1.bf16.msra.mxu0 0
    %801 = vmatprep.subr.bf16.mxu0 0
    %802 = vmatpush1.bf16.msra.mxu0 0
    %803 = vmatprep.subr.bf16.mxu0 0
    %804 = vmatpush1.bf16.msra.mxu0 0
    %805 = vmatprep.subr.bf16.mxu0 0
    %806 = vmatpush1.bf16.msra.mxu0 0
    %807 = vmatprep.subr.bf16.mxu0 0
    %808 = vmatpush1.bf16.msra.mxu0 0
    %809 = vmatprep.subr.bf16.mxu0 0
    %810 = vmatpush1.bf16.msra.mxu0 0
    %811 = vmatprep.subr.bf16.mxu0 0
    %812 = vmatpush1.bf16.msra.mxu0 %v791
    %813 = vmatprep.subr.bf16.mxu0 0
    %814 = vmatpush2.bf16.msra.mxu0 0
    %815 = vmatprep.subr.bf16.mxu0 0
    %816 = vmatpush2.bf16.msra.mxu0 0
    %817 = vmatprep.subr.bf16.mxu0 0
    %818 = vmatpush2.bf16.msra.mxu0 0
    %819 = vmatprep.subr.bf16.mxu0 0
    %820 = vmatpush2.bf16.msra.mxu0 0
    %821 = vmatprep.subr.bf16.mxu0 0
    %822 = vmatpush2.bf16.msra.mxu0 0
    %823 = vmatprep.subr.bf16.mxu0 0
    %824 = vmatpush2.bf16.msra.mxu0 0
    %825 = vmatprep.subr.bf16.mxu0 0
    %826 = vmatpush2.bf16.msra.mxu0 0
    %827 = vmatprep.subr.bf16.mxu0 0
    %828 = vmatpush2.bf16.msra.mxu0 0
    %829 = vmatprep.mubr.bf16.mxu0 0
    %830 = vmatmul.mubr.bf16.gmra.mxu0 %v795
    %v831 = vpop.f32.mrf.mxu0
    %v832 = vadd.f32 %v786, %v831
    %v833 = vpop.f32.mrf.mxu0
    %v834 = vpop.f32.mrf.mxu0
    %v835 = vpop.f32.mrf.mxu0
    %836 = vdwg.mxu0
    %v837 = vmax.f32 %v832, 0.0
    %v838 = vpack.c.bf16 %v837, %v837
    %v839 = vld [vmem:[#allocation8 + $0x1c0] sm:$0xf]
    %v840 = vld [vmem:[#allocation8 + $0x1c4] sm:$0xf]
    %v841 = vld [vmem:[#allocation8 + $0x1c8] sm:$0xf]
    %v842 = vld [vmem:[#allocation8 + $0x1cc] sm:$0xf]
    %v843 = vld [vmem:[#allocation8 + $0x1d0] sm:$0xf]
    %v844 = vld [vmem:[#allocation8 + $0x1d4] sm:$0xf]
    %v845 = vld [vmem:[#allocation8 + $0x1d8] sm:$0xf]
    %v846 = vld [vmem:[#allocation8 + $0x1dc] sm:$0xf]
    %v847 = vld [vmem:[#allocation8 + $0x1e0] sm:$0xf]
    %v848 = vld [vmem:[#allocation8 + $0x1e4] sm:$0xf]
    %v849 = vld [vmem:[#allocation8 + $0x1e8] sm:$0xf]
    %v850 = vld [vmem:[#allocation8 + $0x1ec] sm:$0xf]
    %v851 = vld [vmem:[#allocation8 + $0x1f0] sm:$0xf]
    %v852 = vld [vmem:[#allocation8 + $0x1f4] sm:$0xf]
    %v853 = vld [vmem:[#allocation8 + $0x1f8] sm:$0xf]
    %v854 = vld [vmem:[#allocation8 + $0x1fc] sm:$0xf]
    %v855 = vld [vmem:[#allocation10 + $0x6] sm:$0x1]
    %v856 = vlaneseq
    %v857 = vshrl.u32 %v856, 7
    %v858 = vsub.s32 0, %v857
    %v859 = vrot.slane %v855, %v858
    %v876 = vunpack.c.l.b16 %v839
    %v877 = vunpack.c.l.b16 %v840
    %v878 = vunpack.c.l.b16 %v841
    %v879 = vunpack.c.l.b16 %v842
    %v880 = vunpack.c.l.b16 %v843
    %v881 = vunpack.c.l.b16 %v844
    %v882 = vunpack.c.l.b16 %v845
    %v883 = vunpack.c.l.b16 %v846
    %v884 = vunpack.c.l.b16 %v847
    %v885 = vunpack.c.l.b16 %v848
    %v886 = vunpack.c.l.b16 %v849
    %v887 = vunpack.c.l.b16 %v850
    %v888 = vunpack.c.l.b16 %v851
    %v889 = vunpack.c.l.b16 %v852
    %v890 = vunpack.c.l.b16 %v853
    %v891 = vunpack.c.l.b16 %v854
    %v892 = vpack.c.b16 %v877, %v876
    %v893 = vpack.c.b16 %v879, %v878
    %v894 = vpack.c.b16 %v881, %v880
    %v895 = vpack.c.b16 %v883, %v882
    %v896 = vpack.c.b16 %v885, %v884
    %v897 = vpack.c.b16 %v887, %v886
    %v898 = vpack.c.b16 %v889, %v888
    %v899 = vpack.c.b16 %v891, %v890
    %908 = vmatprep.subr.bf16.mxu0 0
    %909 = vmatpush1.bf16.msra.mxu0 %v899
    %910 = vmatprep.subr.bf16.mxu0 0
    %911 = vmatpush1.bf16.msra.mxu0 %v898
    %912 = vmatprep.subr.bf16.mxu0 0
    %913 = vmatpush1.bf16.msra.mxu0 %v897
    %914 = vmatprep.subr.bf16.mxu0 0
    %915 = vmatpush1.bf16.msra.mxu0 %v896
    %916 = vmatprep.subr.bf16.mxu0 0
    %917 = vmatpush1.bf16.msra.mxu0 %v895
    %918 = vmatprep.subr.bf16.mxu0 0
    %919 = vmatpush1.bf16.msra.mxu0 %v894
    %920 = vmatprep.subr.bf16.mxu0 0
    %921 = vmatpush1.bf16.msra.mxu0 %v893
    %922 = vmatprep.subr.bf16.mxu0 0
    %923 = vmatpush1.bf16.msra.mxu0 %v892
    %924 = vmatprep.subr.bf16.mxu0 0
    %925 = vmatpush2.bf16.msra.mxu0 0
    %926 = vmatprep.subr.bf16.mxu0 0
    %927 = vmatpush2.bf16.msra.mxu0 0
    %928 = vmatprep.subr.bf16.mxu0 0
    %929 = vmatpush2.bf16.msra.mxu0 0
    %930 = vmatprep.subr.bf16.mxu0 0
    %931 = vmatpush2.bf16.msra.mxu0 0
    %932 = vmatprep.subr.bf16.mxu0 0
    %933 = vmatpush2.bf16.msra.mxu0 0
    %934 = vmatprep.subr.bf16.mxu0 0
    %935 = vmatpush2.bf16.msra.mxu0 0
    %936 = vmatprep.subr.bf16.mxu0 0
    %937 = vmatpush2.bf16.msra.mxu0 0
    %938 = vmatprep.subr.bf16.mxu0 0
    %939 = vmatpush2.bf16.msra.mxu0 0
    %940 = vmatprep.mubr.bf16.mxu0 0
    %941 = vmatmul.mubr.bf16.gmra.mxu0 %v838
    %v942 = vpop.f32.mrf.mxu0
    %v943 = vadd.f32 %v859, %v942
    %v944 = vpop.f32.mrf.mxu0
    %v945 = vpop.f32.mrf.mxu0
    %v946 = vpop.f32.mrf.mxu0
    %947 = vdwg.mxu0
    %948 = vst [vmem:[#allocation11] sm:$0xff] %v298
    %949 = vst [vmem:[#allocation11 + $0x8] sm:$0xff] %v311
    %950 = vst [vmem:[#allocation11 + $0x10] sm:$0xff] %v329
    %951 = vst [vmem:[#allocation11 + $0x18] sm:$0xff] %v651
    %952 = vst [vmem:[#allocation11 + $0x20] sm:$0xff] %v774
    %953 = vst.msk [vmem:[#allocation11 + $0x28] sm:$0xff] %vm793, %v669
    %954 = vst [vmem:[#allocation11 + $0x30] sm:$0xff] %v943
    // Predicated region
    $region42: #{tpu_custom_call.1} parent=1 // pred_check
      _
    $region43: #{tpu_custom_call.1} parent=1 // pred_check_branch
      %956 = sbr.rel (0) target = $region45
    $region44: #{tpu_custom_call.1} parent=1 // pred_region
      %s958 = ssub.s32 896, 896
      %959 = vsyncadd [#allocation4], %s958
      %s961 = sshll.u32 [#allocation11], 4
      %s962 = int_to_ptr.vmem [resolvable:$true] %s961
      %964 = dma.vmem_to_hbm [thread:$0]  %s962, 896, %s5, [#allocation4]
    $region45: #{tpu_custom_call.1} parent=1 // pred_fallthru
      _
    // Predicated region
    $region46: #{tpu_custom_call.1} parent=1 // pred_check
      _
    $region47: #{tpu_custom_call.1} parent=1 // pred_check_branch
      %966 = sbr.rel (0) target = $region49
    $region48: #{tpu_custom_call.1} parent=1 // pred_region
      %967 = dma.done [#allocation4], 896
    $region49: #{tpu_custom_call.1} parent=1 // pred_fallthru
      _
    %968 = vsyncpa [#allocation3], 1
    %969 = vsyncpa [#allocation6], 1
    %970 = vsyncpa [#allocation9], 1
    %971 = vsyncpa [#allocation4], 1

</llo_original>
